<compile_context>
chip_gen: v5e
topology: v5e:2x2
jax: 0.10.0
libtpu: 0.0.40
codegen_flags: <defaults>
</compile_context>

<pallas_src>
import functools

import jax
import jax.numpy as jnp
from jax.experimental import pallas as pl
from jax.experimental.pallas import tpu as pltpu


@functools.lru_cache(maxsize=None)
def _vmem_limit():
    """Generation-aware scoped-VMEM limit (v5e/v6e: 64 MiB, v7x: 48 MiB)."""
    try:
        cap = int(pltpu.get_tpu_info().vmem_capacity_bytes)
    except Exception:
        cap = 64 * 1024 * 1024  # conservative: v7x per-TC capacity
    return min(cap * 3 // 4, 64 * 1024 * 1024)


def _pick_tile(dim, pref, align):
    """Largest legal tile <= pref: full-extent, or an `align`-multiple dividing dim."""
    if dim <= pref:
        return dim
    t = max(align, (pref // align) * align)
    while t > align and dim % t != 0:
        t -= align
    return t if dim % t == 0 else dim


def _pick_row_tile(n, pref, align=32):
    """Row tile aligned to 32 sublanes; >=2 row tiles when possible (v7x megacore)."""
    if n >= 2 * align:
        pref = min(pref, max(align, (n // 2) // align * align))
    return _pick_tile(n, pref, align)


# ---------------------------------------------------------------------------
# Initial feature transform:  Z1 = d^-1/2 * (X @ W1_pad)   (lane-dense 128-wide)
# ---------------------------------------------------------------------------
def _feat_transform_kernel(x_ref, d_ref, w_ref, z_ref):
    xd = x_ref[...] * d_ref[...]                                   # (tm, f_in) f32
    z = jnp.dot(xd, w_ref[...], preferred_element_type=jnp.float32)
    z_ref[...] = z.astype(z_ref.dtype)


def feat_transform(x, d, w1_pad, *, tm=512):
    n, f_in = x.shape
    lanes = w1_pad.shape[1]
    tm = _pick_row_tile(n, tm)
    return pl.pallas_call(
        _feat_transform_kernel,
        out_shape=jax.ShapeDtypeStruct((n, lanes), jnp.bfloat16),
        grid_spec=pltpu.PrefetchScalarGridSpec(
            num_scalar_prefetch=0,
            grid=(n // tm,),
            in_specs=[
                pl.BlockSpec((tm, f_in), lambda i: (i, 0)),
                pl.BlockSpec((tm, 1), lambda i: (i, 0)),
                pl.BlockSpec((f_in, lanes), lambda i: (0, 0)),
            ],
            out_specs=pl.BlockSpec((tm, lanes), lambda i: (i, 0)),
        ),
        compiler_params=pltpu.CompilerParams(
            dimension_semantics=("parallel",),
            vmem_limit_bytes=_vmem_limit(),
        ),
    )(x, d, w1_pad)


# ---------------------------------------------------------------------------
# One GCN layer, chained form:
#   acc   = sum_k (A+I)[i,k] @ Z_in[k]                    (Z_in VMEM-resident)
#   H     = relu(d^-1/2 * acc + b)                        (epilogue, f32)
#   Z_out = (d^-1/2 *) (H @ W_next)                       (next layer's input / H3@Wf)
# ---------------------------------------------------------------------------
def _gcn_layer_kernel(a_ref, z_ref, d_ref, b_ref, wn_ref, out_ref, acc_ref,
                      *, tk, scale_next):
    k = pl.program_id(1)
    nk = pl.num_programs(1)

    @pl.when(k == 0)
    def _():
        acc_ref[...] = jnp.zeros_like(acc_ref)

    # int8 {0,1,..} -> bf16 is exact; halves the A HBM stream vs bf16 storage.
    a_bf = a_ref[...].astype(jnp.bfloat16)
    row0 = pl.multiple_of(k * tk, tk)
    acc_ref[...] += jnp.dot(a_bf, z_ref[pl.ds(row0, tk), :],
                            preferred_element_type=jnp.float32)

    @pl.when(k == nk - 1)
    def _():
        d = d_ref[...]                                             # (tm, 1) f32
        h = jnp.maximum(acc_ref[...] * d + b_ref[...], 0.0)       # f32 epilogue
        zn = jnp.dot(h, wn_ref[...], preferred_element_type=jnp.float32)
        if scale_next:
            zn = zn * d
        out_ref[...] = zn.astype(out_ref.dtype)


def gcn_layer(a_i8, z_in, d, b_pad, w_next_pad, *, scale_next, tm=512, tk=2048):
    n = a_i8.shape[0]
    lanes = z_in.shape[1]
    tm = _pick_row_tile(n, tm)
    tk = _pick_tile(n, tk, 128)
    kernel = functools.partial(_gcn_layer_kernel, tk=tk, scale_next=scale_next)
    return pl.pallas_call(
        kernel,
        out_shape=jax.ShapeDtypeStruct((n, lanes), jnp.bfloat16),
        grid_spec=pltpu.PrefetchScalarGridSpec(
            num_scalar_prefetch=0,
            grid=(n // tm, n // tk),
            in_specs=[
                # A tile (int8).  pipeline_mode=pl.Buffered(3) is the sweep knob here
                # if DMA latency jitter shows up; default double-buffering kept.
                pl.BlockSpec((tm, tk), lambda i, k: (i, k)),
                pl.BlockSpec((n, lanes), lambda i, k: (0, 0)),      # Z resident (1 DMA)
                pl.BlockSpec((tm, 1), lambda i, k: (i, 0)),         # d^-1/2 rows of tile i
                pl.BlockSpec((1, lanes), lambda i, k: (0, 0)),      # bias (resident)
                pl.BlockSpec((lanes, lanes), lambda i, k: (0, 0)),  # next-layer W (resident)
            ],
            out_specs=pl.BlockSpec((tm, lanes), lambda i, k: (i, 0)),
            scratch_shapes=[pltpu.VMEM((tm, lanes), jnp.float32)],
        ),
        compiler_params=pltpu.CompilerParams(
            dimension_semantics=("parallel", "arbitrary"),
            vmem_limit_bytes=_vmem_limit(),
        ),
    )(a_i8, z_in, d, b_pad, w_next_pad)


# ---------------------------------------------------------------------------
# global_add_pool + fc (fc weight already applied in layer 3's epilogue):
#   out = P @ (H3 @ Wf) + bf     — lane-dense (G_pad, 128) output slab
# ---------------------------------------------------------------------------
def _pool_fc_kernel(p_ref, zp_ref, bf_ref, out_ref, acc_ref):
    k = pl.program_id(0)

    @pl.when(k == 0)
    def _():
        acc_ref[...] = jnp.broadcast_to(bf_ref[...], acc_ref.shape)

    acc_ref[...] += jnp.dot(p_ref[...], zp_ref[...],
                            preferred_element_type=jnp.float32)

    @pl.when(k == pl.num_programs(0) - 1)
    def _():
        out_ref[...] = acc_ref[...]


def pool_fc(p_pad, zp, bf_pad, num_graphs, n_classes, *, tk=2048):
    g_pad, n = p_pad.shape
    lanes = zp.shape[1]
    tk = _pick_tile(n, tk, 128)
    out = pl.pallas_call(
        _pool_fc_kernel,
        out_shape=jax.ShapeDtypeStruct((g_pad, lanes), jnp.float32),
        grid_spec=pltpu.PrefetchScalarGridSpec(
            num_scalar_prefetch=0,
            grid=(n // tk,),
            in_specs=[
                pl.BlockSpec((g_pad, tk), lambda k: (0, k)),     # pooling one-hot tile
                pl.BlockSpec((tk, lanes), lambda k: (k, 0)),     # H3 @ Wf tile
                pl.BlockSpec((1, lanes), lambda k: (0, 0)),      # bf (resident)
            ],
            out_specs=pl.BlockSpec((g_pad, lanes), lambda k: (0, 0)),
            scratch_shapes=[pltpu.VMEM((g_pad, lanes), jnp.float32)],
        ),
        compiler_params=pltpu.CompilerParams(
            dimension_semantics=("arbitrary",),
            vmem_limit_bytes=_vmem_limit(),
        ),
    )(p_pad, zp, bf_pad)
    return out[:num_graphs, :n_classes]


# ---------------------------------------------------------------------------
# Host-side graph preprocessing (scatter -> dense exact (A+I) int8, d^-1/2, pool one-hot)
# ---------------------------------------------------------------------------
def gcn_norm_adj_factored(edge_index, num_nodes):
    """Factored GCN normalization.

    Returns ((A+I) as exact int8 counts, d^-1/2 column vector).  Duplicate edges sum
    (PyG scatter semantics); self-loops follow add_remaining_self_loops on weight-1
    graphs (diagonal forced to 1).
    """
    src, dst = edge_index[0], edge_index[1]
    a = jnp.zeros((num_nodes, num_nodes), jnp.float32).at[dst, src].add(1.0)
    a = jnp.where(jnp.eye(num_nodes, dtype=bool), 1.0, a)
    deg = jnp.sum(a, axis=1)
    d_inv_sqrt = 1.0 / jnp.sqrt(jnp.maximum(deg, 1e-12))
    return a.astype(jnp.int8), d_inv_sqrt.reshape(num_nodes, 1).astype(jnp.float32)


def simple_gnn_forward(x, edge_index, batch, params, num_graphs, *, tm=512, tk=2048):
    n, f_in = x.shape
    (w1, b1, w2, b2, w3, b3, wf, bf) = params
    hid, f_out, n_classes = w1.shape[1], w3.shape[1], wf.shape[1]

    # Lane-dense feature padding (unmasked stores for all per-layer outputs).
    lanes = max(128, ((max(hid, f_out, n_classes) + 127) // 128) * 128)

    a_i8, d = gcn_norm_adj_factored(edge_index, n)

    w1p = jnp.zeros((f_in, lanes), jnp.float32).at[:, :hid].set(w1)
    w2p = jnp.zeros((lanes, lanes), jnp.float32).at[:hid, :hid].set(w2)
    w3p = jnp.zeros((lanes, lanes), jnp.float32).at[:hid, :f_out].set(w3)
    wfp = jnp.zeros((lanes, lanes), jnp.float32).at[:f_out, :n_classes].set(wf)
    b1p = jnp.zeros((1, lanes), jnp.float32).at[:, :hid].set(b1)
    b2p = jnp.zeros((1, lanes), jnp.float32).at[:, :hid].set(b2)
    b3p = jnp.zeros((1, lanes), jnp.float32).at[:, :f_out].set(b3)
    bfp = jnp.zeros((1, lanes), jnp.float32).at[:, :n_classes].set(bf)

    # Z1 = d^-1/2 * (X @ W1); each layer's epilogue then produces the next Z.
    z = feat_transform(x, d, w1p, tm=tm)
    z = gcn_layer(a_i8, z, d, b1p, w2p, scale_next=True, tm=tm, tk=tk)   # -> Z2
    z = gcn_layer(a_i8, z, d, b2p, w3p, scale_next=True, tm=tm, tk=tk)   # -> Z3
    zp = gcn_layer(a_i8, z, d, b3p, wfp, scale_next=False, tm=tm, tk=tk) # -> H3 @ Wf

    g_pad = max(8, ((num_graphs + 7) // 8) * 8)
    onehot = (batch[None, :] == jnp.arange(num_graphs, dtype=batch.dtype)[:, None])
    p_pad = jnp.zeros((g_pad, n), jnp.bfloat16).at[:num_graphs].set(
        onehot.astype(jnp.bfloat16))
    return pool_fc(p_pad, zp, bfp, num_graphs, n_classes, tk=tk)


if __name__ == "__main__":
    # 2 graphs of 128 nodes each (bidirectional rings), input_dim=8, hidden_dim=32,
    # output_dim=16, 3 output classes.
    NODES, G = 128, 2
    N = NODES * G
    F_IN, HID, F_OUT, N_CLASSES = 8, 32, 16, 3

    s0 = jnp.arange(NODES, dtype=jnp.int32)
    d0 = (s0 + 1) % NODES
    srcs, dsts = [], []
    for g in range(G):
        o = g * NODES
        srcs += [s0 + o, d0 + o]
        dsts += [d0 + o, s0 + o]
    edge_index = jnp.stack([jnp.concatenate(srcs), jnp.concatenate(dsts)])  # [2, E]
    batch = jnp.repeat(jnp.arange(G, dtype=jnp.int32), NODES)

    key = jax.random.PRNGKey(0)
    keys = jax.random.split(key, 9)
    x = jax.random.normal(keys[0], (N, F_IN), jnp.float32)
    w1 = 0.1 * jax.random.normal(keys[1], (F_IN, HID), jnp.float32)
    b1 = 0.1 * jax.random.normal(keys[2], (1, HID), jnp.float32)
    w2 = 0.1 * jax.random.normal(keys[3], (HID, HID), jnp.float32)
    b2 = 0.1 * jax.random.normal(keys[4], (1, HID), jnp.float32)
    w3 = 0.1 * jax.random.normal(keys[5], (HID, F_OUT), jnp.float32)
    b3 = 0.1 * jax.random.normal(keys[6], (1, F_OUT), jnp.float32)
    wf = 0.1 * jax.random.normal(keys[7], (F_OUT, N_CLASSES), jnp.float32)
    bf = 0.1 * jax.random.normal(keys[8], (1, N_CLASSES), jnp.float32)
    params = (w1, b1, w2, b2, w3, b3, wf, bf)

    # tm=64 / tk=128 at this toy size so both grid axes have >1 program.
    out = simple_gnn_forward(x, edge_index, batch, params, G, tm=64, tk=128)
    out = jax.block_until_ready(out)

    # Pure-JAX f32 reference (module semantics); bf16 Z/P matmul inputs give ~1e-3 drift.
    src, dst = edge_index[0], edge_index[1]
    a = jnp.zeros((N, N), jnp.float32).at[dst, src].add(1.0)
    a = jnp.where(jnp.eye(N, dtype=bool), 1.0, a)
    dis = 1.0 / jnp.sqrt(jnp.sum(a, axis=1))
    a_hat = a * dis[:, None] * dis[None, :]
    p = (batch[None, :] == jnp.arange(G, dtype=jnp.int32)[:, None]).astype(jnp.float32)
    h = jnp.maximum(a_hat @ (x @ w1) + b1, 0.0)
    h = jnp.maximum(a_hat @ (h @ w2) + b2, 0.0)
    h = jnp.maximum(a_hat @ (h @ w3) + b3, 0.0)
    ref = (p @ h) @ wf + bf

    assert out.shape == (G, N_CLASSES)
    err = jnp.max(jnp.abs(out - ref))
    assert jnp.allclose(out, ref, atol=2e-2, rtol=2e-2), f"max abs err {err}"

    print("KERNEL_OK")
</pallas_src>

<mosaic_0001>
module attributes {stable_mosaic.version = 11 : i64} {
  func.func @_feat_transform_kernel(%arg0: i32, %arg1: memref<64x8xf32, #tpu.memory_space<vmem>>, %arg2: memref<64x1xf32, #tpu.memory_space<vmem>>, %arg3: memref<8x128xf32, #tpu.memory_space<vmem>>, %arg4: memref<64x128xbf16, #tpu.memory_space<vmem>>) attributes {dimension_semantics = [#tpu.dimension_semantics<parallel>], iteration_bounds = array<i64: 4>, scalar_prefetch = 0 : i64, scratch_operands = 0 : i64, tpu.core_type = #tpu.core_type<tc>, window_params = [{transform_indices = @transform_0, window_bounds = array<i64: 64, 8>}, {transform_indices = @transform_1, window_bounds = array<i64: 64, 1>}, {pipeline_mode = #tpu.pipeline_mode<synchronous>, transform_indices = @transform_2, window_bounds = array<i64: 8, 128>}, {transform_indices = @transform_3, window_bounds = array<i64: 64, 128>}]} {
    %c0 = arith.constant 0 : index
    %c0_0 = arith.constant 0 : index
    %0 = vector.load %arg1[%c0, %c0_0] : memref<64x8xf32, #tpu.memory_space<vmem>>, vector<64x8xf32>
    %c0_1 = arith.constant 0 : index
    %c0_2 = arith.constant 0 : index
    %1 = vector.load %arg2[%c0_1, %c0_2] : memref<64x1xf32, #tpu.memory_space<vmem>>, vector<64x1xf32>
    %2 = vector.broadcast %1 : vector<64x1xf32> to vector<64x8xf32>
    %3 = arith.mulf %0, %2 : vector<64x8xf32>
    %c0_3 = arith.constant 0 : index
    %c0_4 = arith.constant 0 : index
    %4 = vector.load %arg3[%c0_3, %c0_4] : memref<8x128xf32, #tpu.memory_space<vmem>>, vector<8x128xf32>
    %cst = arith.constant dense<0.000000e+00> : vector<64x128xf32>
    %5 = tpu.matmul %3, %4, %cst {dimension_numbers = #tpu.dot_dimension_numbers<[1], [0], [0], [1], [0, 0, 1, 1], [], []>} : vector<64x8xf32>, vector<8x128xf32>, vector<64x128xf32> -> vector<64x128xf32>
    %6 = arith.truncf %5 : vector<64x128xf32> to vector<64x128xbf16>
    %c0_5 = arith.constant 0 : index
    %c0_6 = arith.constant 0 : index
    %7 = vector.load %arg4[%c0_5, %c0_6] : memref<64x128xbf16, #tpu.memory_space<vmem>>, vector<64x128xbf16>
    tpu.vector_store %arg4[%c0_5, %c0_6], %6 {strides = array<i32>} : memref<64x128xbf16, #tpu.memory_space<vmem>>, vector<64x128xbf16>,
    return
  }
  func.func @transform_0(%arg0: i32) -> (i32, i32) {
    %c0_i32 = arith.constant 0 : i32
    %c0_i32_0 = arith.constant 0 : i32
    return %arg0, %c0_i32 : i32, i32
  }
  func.func @transform_1(%arg0: i32) -> (i32, i32) {
    %c0_i32 = arith.constant 0 : i32
    %c0_i32_0 = arith.constant 0 : i32
    return %arg0, %c0_i32 : i32, i32
  }
  func.func @transform_2(%arg0: i32) -> (i32, i32) {
    %c0_i32 = arith.constant 0 : i32
    %c0_i32_0 = arith.constant 0 : i32
    %c0_i32_1 = arith.constant 0 : i32
    return %c0_i32, %c0_i32_0 : i32, i32
  }
  func.func @transform_3(%arg0: i32) -> (i32, i32) {
    %c0_i32 = arith.constant 0 : i32
    %c0_i32_0 = arith.constant 0 : i32
    return %arg0, %c0_i32 : i32, i32
  }
}

</mosaic_0001>

<llo_original>
// kernel: tpu_custom_call.1
$region0: #{tpu_custom_call.1}
  #allocation0 [shape = 'u32[]', space=smem, size = 0x4, offset = 0x4, fixed_abs, tag = 'smem constant byte address 0x4 - core index']
  #allocation1 [shape = 'u32[72,128]{1,0:T(1,128)}', space=vmem, size = 0x9000, scoped, tag = 'internal scratch']
  %s0 = inlined_call_operand.vmem [shape: f32[256,8], index: 0, kind: input, shape index: {}]
  %s1 = inlined_call_operand.vmem [shape: f32[256,1], index: 1, kind: input, shape index: {}]
  %s2 = inlined_call_operand.vmem [shape: f32[8,128], index: 2, kind: input, shape index: {}]
  %s3 = inlined_call_operand.hbm [shape: bf16[256,128], index: 3, kind: output, shape index: {}]
  %s4 = sld [smem:[#allocation0]]
  $region45: #{tpu_custom_call.1} parent=0
    _
  %s6 = ssub.s32 1, %s4
  %s7 = scalar_select 0, %s6, %s4
  $region1: #{tpu_custom_call.1} parent=0
    #allocation2 [shape = 'u8[32768]{0}', space=vmem, size = 0x8000, scoped, tag = 'output window, operand 0']
    #allocation3 [shape = 's32[2]{0}', space=sflag, size = 0x8, scoped, tag = 'scoped memory for tpu_custom_call.1']
    %8 = vsyncpa [#allocation3], 0
    %s9 = scalar_lea.sflag [#allocation3], 1
    %10 = vsyncpa %s9, 0
    loop: start=0, step=1, limit=6
    $region2: #{tpu_custom_call.1} parent=1 // loop_pre_header
      _
    $region3: #{tpu_custom_call.1} parent=1 // loop_header
      %s12 = sphi 0, %s16
      %p13 = scmp.ge.s32.totalorder %s12, 6
      %s22 = sphi 0, %s24
      %s25 = sphi 0, %s22
      %s26 = sphi 0, %s25
      %s42 = sphi 0, %s26
      %s48 = sphi 0, %s50
      %s51 = sphi 0, %s48
      %s52 = sphi 0, %s51
      %s68 = sphi 0, %s52
      %s72 = sphi 0, %s72
      %s74 = sphi 0, %s72
      %s75 = sphi 0, %s74
      %s89 = sphi 0, %s75
      %s95 = sphi 0, %s97
      %s98 = sphi 0, %s95
      %s99 = sphi 0, %s98
      %s115 = sphi 0, %s99
    $region4: #{tpu_custom_call.1} parent=1 // loop_header_branch
      %15 = sbr.rel (%p13) target = $region8
    $region5: #{tpu_custom_call.1} parent=1 // loop_body
      %s17 = ssub.s32 %s12, 1
      %s18 = ssub.s32 %s12, 2
      %s19 = sadd.s32 %s12, 1
      %s20 = ssub.s32 %s12, %s19
      %p21 = scmp.eq.s32.totalorder %s20, 0
      %s23 = sadd.s32 %s22, 1
      %s24 = scalar_select %p21, %s22, %s23
      %p27 = pneg %p21
      %p28 = scmp.eq.s32.totalorder %s12, 3
      %p29 = por %p27, %p28
      %p30 = scmp.ne.s32.totalorder %s22, %s25
      %p31 = scmp.eq.s32.totalorder %s12, 0
      %p32 = por %p30, %p31
      %p33 = scmp.ne.s32.totalorder %s22, %s25
      %p34 = scmp.eq.s32.totalorder %s17, 3
      %p35 = por %p33, %p34
      %p36 = scmp.ne.s32.totalorder %s25, %s26
      %p37 = scmp.eq.s32.totalorder %s17, 0
      %p38 = por %p36, %p37
      %p39 = scmp.ne.s32.totalorder %s25, %s26
      %p40 = scmp.eq.s32.totalorder %s18, 3
      %p41 = por %p39, %p40
      %p43 = scmp.ne.s32.totalorder %s26, %s42
      %p44 = scmp.eq.s32.totalorder %s18, 0
      %p45 = por %p43, %p44
      %s46 = ssub.s32 %s12, %s19
      %p47 = scmp.eq.s32.totalorder %s46, 0
      %s49 = sadd.s32 %s48, 1
      %s50 = scalar_select %p47, %s48, %s49
      %p53 = pneg %p47
      %p54 = scmp.eq.s32.totalorder %s12, 3
      %p55 = por %p53, %p54
      %p56 = scmp.ne.s32.totalorder %s48, %s51
      %p57 = scmp.eq.s32.totalorder %s12, 0
      %p58 = por %p56, %p57
      %p59 = scmp.ne.s32.totalorder %s48, %s51
      %p60 = scmp.eq.s32.totalorder %s17, 3
      %p61 = por %p59, %p60
      %p62 = scmp.ne.s32.totalorder %s51, %s52
      %p63 = scmp.eq.s32.totalorder %s17, 0
      %p64 = por %p62, %p63
      %p65 = scmp.ne.s32.totalorder %s51, %s52
      %p66 = scmp.eq.s32.totalorder %s18, 3
      %p67 = por %p65, %p66
      %p69 = scmp.ne.s32.totalorder %s52, %s68
      %p70 = scmp.eq.s32.totalorder %s18, 0
      %p71 = por %p69, %p70
      %s73 = sadd.s32 %s72, 1
      %p76 = scmp.eq.s32.totalorder %s12, 3
      %p77 = scmp.ne.s32.totalorder %s72, %s74
      %p78 = scmp.eq.s32.totalorder %s12, 0
      %p79 = por %p77, %p78
      %p80 = scmp.ne.s32.totalorder %s72, %s74
      %p81 = scmp.eq.s32.totalorder %s17, 3
      %p82 = por %p80, %p81
      %p83 = scmp.ne.s32.totalorder %s74, %s75
      %p84 = scmp.eq.s32.totalorder %s17, 0
      %p85 = por %p83, %p84
      %p86 = scmp.ne.s32.totalorder %s74, %s75
      %p87 = scmp.eq.s32.totalorder %s18, 3
      %p88 = por %p86, %p87
      %p90 = scmp.ne.s32.totalorder %s75, %s89
      %p91 = scmp.eq.s32.totalorder %s18, 0
      %p92 = por %p90, %p91
      %s93 = ssub.s32 %s12, %s19
      %p94 = scmp.eq.s32.totalorder %s93, 0
      %s96 = sadd.s32 %s95, 1
      %s97 = scalar_select %p94, %s95, %s96
      %p100 = pneg %p94
      %p101 = scmp.eq.s32.totalorder %s12, 3
      %p102 = por %p100, %p101
      %p103 = scmp.ne.s32.totalorder %s95, %s98
      %p104 = scmp.eq.s32.totalorder %s12, 0
      %p105 = por %p103, %p104
      %p106 = scmp.ne.s32.totalorder %s95, %s98
      %p107 = scmp.eq.s32.totalorder %s17, 3
      %p108 = por %p106, %p107
      %p109 = scmp.ne.s32.totalorder %s98, %s99
      %p110 = scmp.eq.s32.totalorder %s17, 0
      %p111 = por %p109, %p110
      %p112 = scmp.ne.s32.totalorder %s98, %s99
      %p113 = scmp.eq.s32.totalorder %s18, 3
      %p114 = por %p112, %p113
      %p116 = scmp.ne.s32.totalorder %s99, %s115
      %p117 = scmp.eq.s32.totalorder %s18, 0
      %p118 = por %p116, %p117
      %p119 = scmp.le.s32.totalorder 1, %s12
      %p120 = scmp.lt.s32.totalorder %s12, 5
      %p121 = pnand %p119, %p120
      %p122 = pneg %p121
      // Predicated region
      $region9: #{tpu_custom_call.1} parent=5 // pred_check
        _
      $region10: #{tpu_custom_call.1} parent=5 // pred_check_branch
        %124 = sbr.rel (%p121) target = $region12
      $region11: #{tpu_custom_call.1} parent=5 // pred_region
        %s125 = ssub.s32 %s12, 1
        // Predicated region
        $region13: #{tpu_custom_call.1} parent=11 // pred_check
          %p126 = pneg %p85
        $region14: #{tpu_custom_call.1} parent=11 // pred_check_branch
          %128 = sbr.rel (%p126) target = $region16
        $region15: #{tpu_custom_call.1} parent=11 // pred_region
          _
        $region16: #{tpu_custom_call.1} parent=11 // pred_fallthru
          _
      $region12: #{tpu_custom_call.1} parent=5 // pred_fallthru
        _
      %p129 = scmp.lt.s32.totalorder %s12, 4
      // Predicated region
      $region17: #{tpu_custom_call.1} parent=5 // pred_check
        %p130 = pneg %p129
      $region18: #{tpu_custom_call.1} parent=5 // pred_check_branch
        %132 = sbr.rel (%p130) target = $region20
      $region19: #{tpu_custom_call.1} parent=5 // pred_region
        // Predicated region
        $region21: #{tpu_custom_call.1} parent=19 // pred_check
          %p133 = pneg %p32
        $region22: #{tpu_custom_call.1} parent=19 // pred_check_branch
          %135 = sbr.rel (%p133) target = $region24
        $region23: #{tpu_custom_call.1} parent=19 // pred_region
          %s136 = smul.u32 8, %s12
          %p137 = scmp.lt.s32.totalorder %s136, 31
          %s138 = scalar_select %p137, %s136, 31
          %s139 = smul.addr %s138, 8
          %s140 = scalar_lea.vmem %s0, %s139
          %s141 = smul.u32 8, %s12
        $region24: #{tpu_custom_call.1} parent=19 // pred_fallthru
          _
        // Predicated region
        $region25: #{tpu_custom_call.1} parent=19 // pred_check
          %p142 = pneg %p58
        $region26: #{tpu_custom_call.1} parent=19 // pred_check_branch
          %144 = sbr.rel (%p142) target = $region28
        $region27: #{tpu_custom_call.1} parent=19 // pred_region
          %s145 = smul.u32 8, %s12
          %p146 = scmp.lt.s32.totalorder %s145, 31
          %s147 = scalar_select %p146, %s145, 31
          %s148 = smul.addr %s147, 8
          %s149 = scalar_lea.vmem %s1, %s148
          %s150 = smul.u32 8, %s12
        $region28: #{tpu_custom_call.1} parent=19 // pred_fallthru
          _
      $region20: #{tpu_custom_call.1} parent=5 // pred_fallthru
        _
      %p151 = scmp.le.s32.totalorder 1, %s12
      %p152 = scmp.lt.s32.totalorder %s12, 5
      %p153 = pnand %p151, %p152
      %p154 = pneg %p153
      // Predicated region
      $region29: #{tpu_custom_call.1} parent=5 // pred_check
        _
      $region30: #{tpu_custom_call.1} parent=5 // pred_check_branch
        %156 = sbr.rel (%p153) target = $region32
      $region31: #{tpu_custom_call.1} parent=5 // pred_region
        %s157 = ssub.s32 %s12, 1
        %s158 = smul.u32 8, %s17
        %p159 = scmp.lt.s32.totalorder %s158, 31
        %s160 = scalar_select %p159, %s158, 31
        %s161 = smul.addr %s160, 8
        %s162 = scalar_lea.vmem %s0, %s161
        %p163 = pneg %p38
        %p164 = pneg %p35
        %s165 = smul.u32 8, %s17
        %p166 = scmp.lt.s32.totalorder %s165, 31
        %s167 = scalar_select %p166, %s165, 31
        %s168 = smul.addr %s167, 8
        %s169 = scalar_lea.vmem %s1, %s168
        %p170 = pneg %p64
        %p171 = pneg %p61
        %p172 = pneg %p85
        %p173 = pneg %p82
        %p174 = pneg %p111
        %p175 = pneg %p108
        %s176 = sand.u32 %s98, 1
        %s177 = scalar_lea.sflag [#allocation3], %s176
        %s178 = sand.u32 %s98, 1
        %s179 = smul.addr %s178, 32
        %s180 = scalar_lea.vmem [#allocation2], %s179
        %s181 = smul.u32 8, %s17
        %p182 = scmp.lt.s32.totalorder %s181, 31
        %s183 = scalar_select %p182, %s181, 31
        %s184 = smul.addr %s183, 8
        %s185 = scalar_lea.vmem %s0, %s184
        %s186 = smul.u32 8, %s17
        %s187 = smul.u32 8, %s17
        %p188 = scmp.lt.s32.totalorder %s187, 31
        %s189 = scalar_select %p188, %s187, 31
        %s190 = smul.addr %s189, 8
        %s191 = scalar_lea.vmem %s1, %s190
        %s192 = smul.u32 8, %s17
        %s193 = smul.u32 8, %s17
        %v194 = vld [vmem:[%s185] sm:$0xff]
        %v195 = vld [vmem:[%s185 + $0x8] sm:$0xff]
        %v196 = vld [vmem:[%s185 + $0x10] sm:$0xff]
        %v197 = vld [vmem:[%s185 + $0x18] sm:$0xff]
        %v198 = vld [vmem:[%s185 + $0x20] sm:$0xff]
        %v199 = vld [vmem:[%s185 + $0x28] sm:$0xff]
        %v200 = vld [vmem:[%s185 + $0x30] sm:$0xff]
        %v201 = vld [vmem:[%s185 + $0x38] sm:$0xff]
        %v202 = vld [vmem:[%s191] sm:$0xff]
        %v203 = vld [vmem:[%s191 + $0x8] sm:$0xff]
        %v204 = vld [vmem:[%s191 + $0x10] sm:$0xff]
        %v205 = vld [vmem:[%s191 + $0x18] sm:$0xff]
        %v206 = vld [vmem:[%s191 + $0x20] sm:$0xff]
        %v207 = vld [vmem:[%s191 + $0x28] sm:$0xff]
        %v208 = vld [vmem:[%s191 + $0x30] sm:$0xff]
        %v209 = vld [vmem:[%s191 + $0x38] sm:$0xff]
        %211 = vset.pattern.permute.xlu0 0
        %212 = vperm.xlu0 %211, %v202
        %v213 = vpop.permute.xlu0 %212
        %216 = vset.pattern.permute.xlu0 0
        %217 = vperm.xlu0 %216, %v203
        %v218 = vpop.permute.xlu0 %217
        %221 = vset.pattern.permute.xlu0 0
        %222 = vperm.xlu0 %221, %v204
        %v223 = vpop.permute.xlu0 %222
        %226 = vset.pattern.permute.xlu0 0
        %227 = vperm.xlu0 %226, %v205
        %v228 = vpop.permute.xlu0 %227
        %231 = vset.pattern.permute.xlu0 0
        %232 = vperm.xlu0 %231, %v206
        %v233 = vpop.permute.xlu0 %232
        %236 = vset.pattern.permute.xlu0 0
        %237 = vperm.xlu0 %236, %v207
        %v238 = vpop.permute.xlu0 %237
        %241 = vset.pattern.permute.xlu0 0
        %242 = vperm.xlu0 %241, %v208
        %v243 = vpop.permute.xlu0 %242
        %246 = vset.pattern.permute.xlu0 0
        %247 = vperm.xlu0 %246, %v209
        %v248 = vpop.permute.xlu0 %247
        %v250 = vmul.f32 %v194, %v213
        %v251 = vmul.f32 %v195, %v218
        %v252 = vmul.f32 %v196, %v223
        %v253 = vmul.f32 %v197, %v228
        %v254 = vmul.f32 %v198, %v233
        %v255 = vmul.f32 %v199, %v238
        %v256 = vmul.f32 %v200, %v243
        %v257 = vmul.f32 %v201, %v248
        %v258 = vld [vmem:[%s2] sm:$0xff]
        %vm259 = vcmask 64512
        %v261 = vsel %vm259, %v250, 0
        %v264 = vsel %vm259, %v251, 0
        %v267 = vsel %vm259, %v252, 0
        %v270 = vsel %vm259, %v253, 0
        %v273 = vsel %vm259, %v254, 0
        %v276 = vsel %vm259, %v255, 0
        %v279 = vsel %vm259, %v256, 0
        %v282 = vsel %vm259, %v257, 0
        %284 = vmatpush.msra.mxu0 0.0
        %285 = vmatpush.msra.mxu0 0.0
        %286 = vmatpush.msra.mxu0 0.0
        %287 = vmatpush.msra.mxu0 0.0
        %288 = vmatpush.msra.mxu0 0.0
        %289 = vmatpush.msra.mxu0 0.0
        %290 = vmatpush.msra.mxu0 0.0
        %291 = vmatpush.msra.mxu0 0.0
        %292 = vmatpush.msra.mxu0 0.0
        %293 = vmatpush.msra.mxu0 0.0
        %294 = vmatpush.msra.mxu0 0.0
        %295 = vmatpush.msra.mxu0 0.0
        %296 = vmatpush.msra.mxu0 0.0
        %297 = vmatpush.msra.mxu0 0.0
        %298 = vmatpush.msra.mxu0 0.0
        %299 = vmatpush.msra.mxu0 %v258
        %300 = vmatmul.f32.gmra.mxu0 %v261
        %v301 = vpop.f32.mrf.mxu0
        %v302 = vadd.f32 0.0, %v301
        %303 = vmatmul.f32.gmra.mxu0 %v264
        %v304 = vpop.f32.mrf.mxu0
        %v305 = vadd.f32 0.0, %v304
        %306 = vmatmul.f32.gmra.mxu0 %v267
        %v307 = vpop.f32.mrf.mxu0
        %v308 = vadd.f32 0.0, %v307
        %309 = vmatmul.f32.gmra.mxu0 %v270
        %v310 = vpop.f32.mrf.mxu0
        %v311 = vadd.f32 0.0, %v310
        %312 = vmatmul.f32.gmra.mxu0 %v273
        %v313 = vpop.f32.mrf.mxu0
        %v314 = vadd.f32 0.0, %v313
        %315 = vmatmul.f32.gmra.mxu0 %v276
        %v316 = vpop.f32.mrf.mxu0
        %v317 = vadd.f32 0.0, %v316
        %318 = vmatmul.f32.gmra.mxu0 %v279
        %v319 = vpop.f32.mrf.mxu0
        %v320 = vadd.f32 0.0, %v319
        %321 = vmatmul.f32.gmra.mxu0 %v282
        %v322 = vpop.f32.mrf.mxu0
        %v323 = vadd.f32 0.0, %v322
        %324 = vdwg.mxu0
        %v325 = vpack.c.bf16 %v302, %v302
        %v326 = vpack.c.bf16 %v305, %v305
        %v327 = vpack.c.bf16 %v308, %v308
        %v328 = vpack.c.bf16 %v311, %v311
        %v329 = vpack.c.bf16 %v314, %v314
        %v330 = vpack.c.bf16 %v317, %v317
        %v331 = vpack.c.bf16 %v320, %v320
        %v332 = vpack.c.bf16 %v323, %v323
        %333 = vst [vmem:[%s180] sm:$0xf] %v325
        %334 = vst [vmem:[%s180 + $0x4] sm:$0xf] %v326
        %335 = vst [vmem:[%s180 + $0x8] sm:$0xf] %v327
        %336 = vst [vmem:[%s180 + $0xc] sm:$0xf] %v328
        %337 = vst [vmem:[%s180 + $0x10] sm:$0xf] %v329
        %338 = vst [vmem:[%s180 + $0x14] sm:$0xf] %v330
        %339 = vst [vmem:[%s180 + $0x18] sm:$0xf] %v331
        %340 = vst [vmem:[%s180 + $0x1c] sm:$0xf] %v332
        %s341 = sand.u32 %s98, 1
        %s342 = scalar_lea.sflag [#allocation3], %s341
        %s343 = sand.u32 %s98, 1
        %s344 = smul.addr %s343, 32
        %s345 = scalar_lea.vmem [#allocation2], %s344
        // Predicated region
        $region33: #{tpu_custom_call.1} parent=31 // pred_check
          %p346 = pneg %p108
        $region34: #{tpu_custom_call.1} parent=31 // pred_check_branch
          %348 = sbr.rel (%p346) target = $region36
        $region35: #{tpu_custom_call.1} parent=31 // pred_region
          %s349 = smul.u32 8, %s17
          %351 = vsyncadd %s342, 0
          %s352 = smul.addr %s349, 4
          %s353 = scalar_lea.hbm %s3, %s352
          %s354 = sshll.u32 %s345, 4
          %s355 = int_to_ptr.vmem [resolvable:$true] %s354
          %s356 = sshll.u32 %s353, 4
          %s357 = int_to_ptr.hbm [resolvable:$true] %s356
          %362 = dma.vmem_to_hbm [thread:$0]  %s355, 512, %s357, %s342, 64, 64, 4
        $region36: #{tpu_custom_call.1} parent=31 // pred_fallthru
          _
      $region32: #{tpu_custom_call.1} parent=5 // pred_fallthru
        _
      %p363 = scmp.le.s32.totalorder 2, %s12
      // Predicated region
      $region37: #{tpu_custom_call.1} parent=5 // pred_check
        %p364 = pneg %p363
      $region38: #{tpu_custom_call.1} parent=5 // pred_check_branch
        %366 = sbr.rel (%p364) target = $region40
      $region39: #{tpu_custom_call.1} parent=5 // pred_region
        %s367 = ssub.s32 %s12, 2
        // Predicated region
        $region41: #{tpu_custom_call.1} parent=39 // pred_check
          %p368 = pneg %p114
        $region42: #{tpu_custom_call.1} parent=39 // pred_check_branch
          %370 = sbr.rel (%p368) target = $region44
        $region43: #{tpu_custom_call.1} parent=39 // pred_region
          %s371 = sand.u32 %s99, 1
          %s372 = scalar_lea.sflag [#allocation3], %s371
          %s373 = sand.u32 %s99, 1
          %s374 = smul.addr %s373, 32
          %s375 = scalar_lea.vmem [#allocation2], %s374
          %377 = dma.done %s372, 512
        $region44: #{tpu_custom_call.1} parent=39 // pred_fallthru
          _
      $region40: #{tpu_custom_call.1} parent=5 // pred_fallthru
        _
    $region6: #{tpu_custom_call.1} parent=1 // loop_footer
      %s16 = sadd.s32 1, %s12
    $region7: #{tpu_custom_call.1} parent=1 // loop_footer_branch
      %11 = sbr.rel target = $region3
    $region8: #{tpu_custom_call.1} parent=1 // loop_exit
      _
    %378 = vsyncpa [#allocation3], 1
    %s379 = scalar_lea.sflag [#allocation3], 1
    %380 = vsyncpa %s379, 1

</llo_original>
